<compile_context>
chip_gen: v7x
topology: tpu7x:2x2x1
jax: 0.10.0
libtpu: 0.0.40
codegen_flags: <defaults>
</compile_context>

<pallas_src>
import jax
import jax.numpy as jnp
from jax.experimental import pallas as pl
from jax.experimental.pallas import tpu as pltpu


def _round_up(x, m):
    return ((x + m - 1) // m) * m


def _make_value_kernel(activation):
    if activation == "tanh":
        act = jnp.tanh
    elif activation == "relu":
        act = lambda z: jnp.maximum(z, jnp.float32(0.0))
    elif activation == "sigmoid":
        act = jax.nn.sigmoid
    else:
        raise ValueError(f"unsupported activation: {activation}")

    def kernel(x_ref, w1_ref, b1_ref, w2_ref, b2_ref, w3_ref, b3_ref, out_ref):
        # x_ref: (TB, D_in) bf16 batch tile. Weights are resident across all steps.
        x = x_ref[...]
        # Layer 1: bf16 MXU matmul, f32 accumulation, f32 bias + activation.
        h1 = act(jnp.dot(x, w1_ref[...], preferred_element_type=jnp.float32)
                 + b1_ref[...])
        # Layer 2.
        h2 = act(jnp.dot(h1.astype(jnp.bfloat16), w2_ref[...],
                         preferred_element_type=jnp.float32) + b2_ref[...])
        # Value head (out_features == 1): VPU multiply + lane reduce instead of an
        # N=1 MXU pass (which would waste 255/256 of the systolic array + masked vst).
        v = jnp.sum(h2 * w3_ref[...], axis=-1, keepdims=True) + b3_ref[...]
        out_ref[...] = v.astype(out_ref.dtype)

    return kernel


def value_forward(x, params, activation="tanh", block_b=512):
    """Forward pass of the Value critic.

    x: (B, n, state_dim) or (B, n*state_dim); returns (B, 1) float32.
    params: (w1, b1, w2, b2, w3, b3); w_i shaped (in, out), b_i (1, out).
    Note: this fused kernel covers the module's default two-hidden-layer config.
    """
    B = x.shape[0]
    x2d = x.reshape(B, -1)
    D_in = x2d.shape[1]
    w1, b1, w2, b2, w3, b3 = params
    H1, H2 = w1.shape[1], w2.shape[1]
    assert w1.shape[0] == D_in and w2.shape[0] == H1 and w3.shape[0] == H2

    # bf16 inputs/weights for the MXU matmuls; biases / head column kept in f32.
    x_bf = x2d.astype(jnp.bfloat16)
    w1_bf = w1.astype(jnp.bfloat16)
    w2_bf = w2.astype(jnp.bfloat16)
    b1_f = b1.reshape(1, H1).astype(jnp.float32)
    b2_f = b2.reshape(1, H2).astype(jnp.float32)
    w3_row = w3.reshape(1, H2).astype(jnp.float32)  # head column as a lane row
    b3_f = b3.reshape(1, 1).astype(jnp.float32)

    # Batch tile: sublane-aligned (multiple of 8), capped at block_b.
    tb = min(_round_up(block_b, 8), max(8, _round_up(B, 8)))
    Bp = _round_up(B, tb)
    if Bp != B:
        # Zero-pad tail rows; padded outputs are sliced off below.
        x_bf = jnp.pad(x_bf, ((0, Bp - B), (0, 0)))
    grid = (Bp // tb,)

    # Explicit VMEM budget (v7x has only 64 MiB physical): double-buffered x/out
    # tiles + resident weights + live f32 intermediates, with headroom.
    weight_bytes = (D_in * H1 + H1 * H2) * 2 + (H1 + 2 * H2 + 1) * 4
    tile_bytes = 2 * tb * D_in * 2 + 2 * tb * 4
    inter_bytes = 2 * tb * (H1 + H2) * 4
    vmem_limit = min(
        int(1.5 * (weight_bytes + tile_bytes + inter_bytes)) + (16 << 20),
        64 << 20,
    )

    n_trans = Bp * (H1 + H2) if activation in ("tanh", "sigmoid") else 0
    cost = pl.CostEstimate(
        flops=2 * Bp * (D_in * H1 + H1 * H2 + H2),
        transcendentals=n_trans,
        bytes_accessed=Bp * D_in * 2 + weight_bytes + Bp * 4,
    )

    const = lambda i: (0, 0)
    out_padded = pl.pallas_call(
        _make_value_kernel(activation),
        out_shape=jax.ShapeDtypeStruct((Bp, 1), jnp.float32),
        grid=grid,
        in_specs=[
            pl.BlockSpec((tb, D_in), lambda i: (i, 0)),  # x: pipelined per batch tile
            pl.BlockSpec((D_in, H1), const),             # weights: resident (DMA once)
            pl.BlockSpec((1, H1), const),
            pl.BlockSpec((H1, H2), const),
            pl.BlockSpec((1, H2), const),
            pl.BlockSpec((1, H2), const),
            pl.BlockSpec((1, 1), const),
        ],
        out_specs=pl.BlockSpec((tb, 1), lambda i: (i, 0)),
        compiler_params=pltpu.CompilerParams(
            dimension_semantics=("parallel",),  # shard batch tiles across v7x's 2 TCs
            vmem_limit_bytes=vmem_limit,
        ),
        cost_estimate=cost,
    )(x_bf, w1_bf, b1_f, w2_bf, b2_f, w3_row, b3_f)

    return out_padded[:B]


def init_value_params(key, n, state_dim, hidden_size=(128, 128)):
    """Deterministic synthetic init matching the nn.Linear shapes in Value."""
    dims = [n * state_dim] + list(hidden_size) + [1]
    params = []
    for i in range(len(dims) - 1):
        key, kw, kb = jax.random.split(key, 3)
        fan_in, fan_out = dims[i], dims[i + 1]
        # set_init-style: small-std normal weights, small biases.
        w = jax.random.normal(kw, (fan_in, fan_out), jnp.float32) * 0.1
        b = jax.random.normal(kb, (1, fan_out), jnp.float32) * 0.01
        params += [w, b]
    return tuple(params)


def value_reference(x, params, activation="tanh"):
    """Plain-JAX f32 reference for correctness checking."""
    acts = {"tanh": jnp.tanh,
            "relu": lambda z: jnp.maximum(z, 0.0),
            "sigmoid": jax.nn.sigmoid}
    act = acts[activation]
    w1, b1, w2, b2, w3, b3 = params
    h = x.reshape(x.shape[0], -1).astype(jnp.float32)
    h = act(h @ w1 + b1)
    h = act(h @ w2 + b2)
    return h @ w3 + b3


if __name__ == "__main__":
    # Small shapes consistent with the module: batch=2, n=2, state_dim=16,
    # hidden_size=(32, 32).
    key = jax.random.PRNGKey(0)
    k_x, k_p = jax.random.split(key)

    B, n, state_dim = 2, 2, 16
    hidden_size = (32, 32)

    x = jax.random.normal(k_x, (B, n, state_dim), jnp.float32)
    params = init_value_params(k_p, n, state_dim, hidden_size)

    out = jax.block_until_ready(value_forward(x, params))
    ref = value_reference(x, params)

    assert out.shape == (B, 1), out.shape
    # bf16 activations/weights inside the kernel -> ~1e-2 level divergence vs f32 ref.
    assert jnp.allclose(out, ref, atol=5e-2, rtol=5e-2), (out, ref)

    print("KERNEL_OK")
</pallas_src>

<mosaic_0001>
module attributes {stable_mosaic.version = 11 : i64} {
  func.func @kernel(%arg0: i32, %arg1: memref<8x32xbf16, #tpu.memory_space<vmem>>, %arg2: memref<32x32xbf16, #tpu.memory_space<vmem>>, %arg3: memref<1x32xf32, #tpu.memory_space<vmem>>, %arg4: memref<32x32xbf16, #tpu.memory_space<vmem>>, %arg5: memref<1x32xf32, #tpu.memory_space<vmem>>, %arg6: memref<1x32xf32, #tpu.memory_space<vmem>>, %arg7: memref<1x1xf32, #tpu.memory_space<vmem>>, %arg8: memref<8x1xf32, #tpu.memory_space<vmem>>) attributes {dimension_semantics = [#tpu.dimension_semantics<parallel>], iteration_bounds = array<i64: 1>, scalar_prefetch = 0 : i64, scratch_operands = 0 : i64, tpu.core_type = #tpu.core_type<tc>, window_params = [{transform_indices = @transform_0, window_bounds = array<i64: 8, 32>}, {pipeline_mode = #tpu.pipeline_mode<synchronous>, transform_indices = @transform_1, window_bounds = array<i64: 32, 32>}, {pipeline_mode = #tpu.pipeline_mode<synchronous>, transform_indices = @transform_2, window_bounds = array<i64: 1, 32>}, {pipeline_mode = #tpu.pipeline_mode<synchronous>, transform_indices = @transform_3, window_bounds = array<i64: 32, 32>}, {pipeline_mode = #tpu.pipeline_mode<synchronous>, transform_indices = @transform_4, window_bounds = array<i64: 1, 32>}, {pipeline_mode = #tpu.pipeline_mode<synchronous>, transform_indices = @transform_5, window_bounds = array<i64: 1, 32>}, {pipeline_mode = #tpu.pipeline_mode<synchronous>, transform_indices = @transform_6, window_bounds = array<i64: 1, 1>}, {transform_indices = @transform_7, window_bounds = array<i64: 8, 1>}]} {
    %c0 = arith.constant 0 : index
    %c0_0 = arith.constant 0 : index
    %0 = vector.load %arg1[%c0, %c0_0] : memref<8x32xbf16, #tpu.memory_space<vmem>>, vector<8x32xbf16>
    %c0_1 = arith.constant 0 : index
    %c0_2 = arith.constant 0 : index
    %1 = vector.load %arg2[%c0_1, %c0_2] : memref<32x32xbf16, #tpu.memory_space<vmem>>, vector<32x32xbf16>
    %cst = arith.constant dense<0.000000e+00> : vector<8x32xf32>
    %2 = tpu.matmul %0, %1, %cst {dimension_numbers = #tpu.dot_dimension_numbers<[1], [0], [0], [1], [0, 0, 1, 1], [], []>} : vector<8x32xbf16>, vector<32x32xbf16>, vector<8x32xf32> -> vector<8x32xf32>
    %c0_3 = arith.constant 0 : index
    %c0_4 = arith.constant 0 : index
    %3 = vector.load %arg3[%c0_3, %c0_4] : memref<1x32xf32, #tpu.memory_space<vmem>>, vector<1x32xf32>
    %4 = vector.broadcast %3 : vector<1x32xf32> to vector<8x32xf32>
    %5 = arith.addf %2, %4 : vector<8x32xf32>
    %6 = math.tanh %5 : vector<8x32xf32>
    %7 = arith.truncf %6 : vector<8x32xf32> to vector<8x32xbf16>
    %c0_5 = arith.constant 0 : index
    %c0_6 = arith.constant 0 : index
    %8 = vector.load %arg4[%c0_5, %c0_6] : memref<32x32xbf16, #tpu.memory_space<vmem>>, vector<32x32xbf16>
    %cst_7 = arith.constant dense<0.000000e+00> : vector<8x32xf32>
    %9 = tpu.matmul %7, %8, %cst_7 {dimension_numbers = #tpu.dot_dimension_numbers<[1], [0], [0], [1], [0, 0, 1, 1], [], []>} : vector<8x32xbf16>, vector<32x32xbf16>, vector<8x32xf32> -> vector<8x32xf32>
    %c0_8 = arith.constant 0 : index
    %c0_9 = arith.constant 0 : index
    %10 = vector.load %arg5[%c0_8, %c0_9] : memref<1x32xf32, #tpu.memory_space<vmem>>, vector<1x32xf32>
    %11 = vector.broadcast %10 : vector<1x32xf32> to vector<8x32xf32>
    %12 = arith.addf %9, %11 : vector<8x32xf32>
    %13 = math.tanh %12 : vector<8x32xf32>
    %c0_10 = arith.constant 0 : index
    %c0_11 = arith.constant 0 : index
    %14 = vector.load %arg6[%c0_10, %c0_11] : memref<1x32xf32, #tpu.memory_space<vmem>>, vector<1x32xf32>
    %15 = vector.broadcast %14 : vector<1x32xf32> to vector<8x32xf32>
    %16 = arith.mulf %13, %15 : vector<8x32xf32>
    %cst_12 = arith.constant dense<0.000000e+00> : vector<8xf32>
    %17 = vector.multi_reduction <add>, %16, %cst_12 [1] : vector<8x32xf32> to vector<8xf32>
    %18 = vector.shape_cast %17 : vector<8xf32> to vector<8x1xf32>
    %c0_13 = arith.constant 0 : index
    %c0_14 = arith.constant 0 : index
    %19 = vector.load %arg7[%c0_13, %c0_14] : memref<1x1xf32, #tpu.memory_space<vmem>>, vector<1x1xf32>
    %20 = vector.broadcast %19 : vector<1x1xf32> to vector<8x1xf32>
    %21 = arith.addf %18, %20 : vector<8x1xf32>
    %c0_15 = arith.constant 0 : index
    %c0_16 = arith.constant 0 : index
    %22 = vector.load %arg8[%c0_15, %c0_16] : memref<8x1xf32, #tpu.memory_space<vmem>>, vector<8x1xf32>
    tpu.vector_store %arg8[%c0_15, %c0_16], %21 {strides = array<i32>} : memref<8x1xf32, #tpu.memory_space<vmem>>, vector<8x1xf32>,
    return
  }
  func.func @transform_0(%arg0: i32) -> (i32, i32) {
    %c0_i32 = arith.constant 0 : i32
    %c0_i32_0 = arith.constant 0 : i32
    return %arg0, %c0_i32 : i32, i32
  }
  func.func @transform_1(%arg0: i32) -> (i32, i32) {
    %c0_i32 = arith.constant 0 : i32
    %c0_i32_0 = arith.constant 0 : i32
    %c0_i32_1 = arith.constant 0 : i32
    return %c0_i32, %c0_i32_0 : i32, i32
  }
  func.func @transform_2(%arg0: i32) -> (i32, i32) {
    %c0_i32 = arith.constant 0 : i32
    %c0_i32_0 = arith.constant 0 : i32
    %c0_i32_1 = arith.constant 0 : i32
    return %c0_i32, %c0_i32_0 : i32, i32
  }
  func.func @transform_3(%arg0: i32) -> (i32, i32) {
    %c0_i32 = arith.constant 0 : i32
    %c0_i32_0 = arith.constant 0 : i32
    %c0_i32_1 = arith.constant 0 : i32
    return %c0_i32, %c0_i32_0 : i32, i32
  }
  func.func @transform_4(%arg0: i32) -> (i32, i32) {
    %c0_i32 = arith.constant 0 : i32
    %c0_i32_0 = arith.constant 0 : i32
    %c0_i32_1 = arith.constant 0 : i32
    return %c0_i32, %c0_i32_0 : i32, i32
  }
  func.func @transform_5(%arg0: i32) -> (i32, i32) {
    %c0_i32 = arith.constant 0 : i32
    %c0_i32_0 = arith.constant 0 : i32
    %c0_i32_1 = arith.constant 0 : i32
    return %c0_i32, %c0_i32_0 : i32, i32
  }
  func.func @transform_6(%arg0: i32) -> (i32, i32) {
    %c0_i32 = arith.constant 0 : i32
    %c0_i32_0 = arith.constant 0 : i32
    %c0_i32_1 = arith.constant 0 : i32
    return %c0_i32, %c0_i32_0 : i32, i32
  }
  func.func @transform_7(%arg0: i32) -> (i32, i32) {
    %c0_i32 = arith.constant 0 : i32
    %c0_i32_0 = arith.constant 0 : i32
    return %arg0, %c0_i32 : i32, i32
  }
}

</mosaic_0001>

<llo_original>
// kernel: tpu_custom_call.1
$region0: #{tpu_custom_call.1}
  #allocation0 [shape = 'u32[]', space=smem, size = 0x4, offset = 0x4, fixed_abs, tag = 'smem constant byte address 0x4 - core index']
  #allocation1 [shape = 'u32[144,128]{1,0:T(1,128)}', space=vmem, size = 0x12000, scoped, tag = 'internal scratch']
  #allocation2 [shape = 'f32[1,1]{1,0:T(1,128)S(1)}', space=vmem, size = 0x200, scoped, tag = 'scoped memory for tpu_custom_call.1']
  %s0 = inlined_call_operand.hbm [shape: bf16[8,32], index: 0, kind: input, shape index: {}]
  %s1 = inlined_call_operand.hbm [shape: bf16[32,32], index: 1, kind: input, shape index: {}]
  %s2 = inlined_call_operand.vmem [shape: f32[1,32], index: 2, kind: input, shape index: {}]
  %s3 = inlined_call_operand.hbm [shape: bf16[32,32], index: 3, kind: input, shape index: {}]
  %s4 = inlined_call_operand.vmem [shape: f32[1,32], index: 4, kind: input, shape index: {}]
  %s5 = inlined_call_operand.vmem [shape: f32[1,32], index: 5, kind: input, shape index: {}]
  %s6 = inlined_call_operand.<no memory space> [shape: f32[1,1], index: 6, kind: input, shape index: {}]
  %s7 = inlined_call_operand.vmem [shape: f32[8,1], index: 7, kind: output, shape index: {}]
  %s8 = sld [smem:[#allocation0]]
  $region50: #{tpu_custom_call.1} parent=0
    _
  %s10 = ssub.s32 1, %s8
  %s11 = scalar_select 0, %s10, %s8
  %v12 = vstv %s6
  %13 = vst [vmem:[#allocation2] sm:$0x1] %v12
  $region1: #{tpu_custom_call.1} parent=0
    #allocation3 [shape = 'u8[2048]{0}', space=vmem, size = 0x800, scoped, tag = 'input window, operand 0, single buffered']
    #allocation4 [shape = 's32[1]{0}', space=sflag, size = 0x4, scoped, tag = 'scoped memory for tpu_custom_call.1']
    #allocation5 [shape = 'u8[8192]{0}', space=vmem, size = 0x2000, scoped, tag = 'input window, operand 1, single buffered']
    #allocation6 [shape = 's32[1]{0}', space=sflag, size = 0x4, scoped, tag = 'scoped memory for tpu_custom_call.1']
    #allocation7 [shape = 'u8[8192]{0}', space=vmem, size = 0x2000, scoped, tag = 'input window, operand 3, single buffered']
    %14 = vsyncpa [#allocation4], 0
    %15 = vsyncpa [#allocation6], 0
    // Predicated region
    $region2: #{tpu_custom_call.1} parent=1 // pred_check
      _
    $region3: #{tpu_custom_call.1} parent=1 // pred_check_branch
      %17 = sbr.rel (0) target = $region5
    $region4: #{tpu_custom_call.1} parent=1 // pred_region
      %s19 = ssub.s32 64, 64
      %20 = vsyncadd [#allocation4], %s19
      %s22 = sshll.u32 [#allocation3], 4
      %s23 = int_to_ptr.vmem [resolvable:$true] %s22
      %25 = dma.hbm_to_vmem [thread:$0]  %s0, 64, %s23, [#allocation4]
    $region5: #{tpu_custom_call.1} parent=1 // pred_fallthru
      _
    // Predicated region
    $region6: #{tpu_custom_call.1} parent=1 // pred_check
      _
    $region7: #{tpu_custom_call.1} parent=1 // pred_check_branch
      %27 = sbr.rel (0) target = $region9
    $region8: #{tpu_custom_call.1} parent=1 // pred_region
      %s29 = ssub.s32 256, 256
      %30 = vsyncadd [#allocation6], %s29
      %s31 = sshll.u32 [#allocation5], 4
      %s32 = int_to_ptr.vmem [resolvable:$true] %s31
      %37 = dma.hbm_to_vmem [thread:$0]  %s1, 256, %s32, [#allocation6], 64, 64, 4
    $region9: #{tpu_custom_call.1} parent=1 // pred_fallthru
      _
    // Predicated region
    $region10: #{tpu_custom_call.1} parent=1 // pred_check
      _
    $region11: #{tpu_custom_call.1} parent=1 // pred_check_branch
      %39 = sbr.rel (0) target = $region13
    $region12: #{tpu_custom_call.1} parent=1 // pred_region
      _
    $region13: #{tpu_custom_call.1} parent=1 // pred_fallthru
      _
    // Predicated region
    $region14: #{tpu_custom_call.1} parent=1 // pred_check
      _
    $region15: #{tpu_custom_call.1} parent=1 // pred_check_branch
      %41 = sbr.rel (0) target = $region17
    $region16: #{tpu_custom_call.1} parent=1 // pred_region
      %s43 = ssub.s32 256, 256
      %44 = vsyncadd [#allocation6], %s43
      %s45 = sshll.u32 [#allocation7], 4
      %s46 = int_to_ptr.vmem [resolvable:$true] %s45
      %51 = dma.hbm_to_vmem [thread:$0]  %s3, 256, %s46, [#allocation6], 64, 64, 4
    $region17: #{tpu_custom_call.1} parent=1 // pred_fallthru
      _
    // Predicated region
    $region18: #{tpu_custom_call.1} parent=1 // pred_check
      _
    $region19: #{tpu_custom_call.1} parent=1 // pred_check_branch
      %53 = sbr.rel (0) target = $region21
    $region20: #{tpu_custom_call.1} parent=1 // pred_region
      _
    $region21: #{tpu_custom_call.1} parent=1 // pred_fallthru
      _
    // Predicated region
    $region22: #{tpu_custom_call.1} parent=1 // pred_check
      _
    $region23: #{tpu_custom_call.1} parent=1 // pred_check_branch
      %55 = sbr.rel (0) target = $region25
    $region24: #{tpu_custom_call.1} parent=1 // pred_region
      _
    $region25: #{tpu_custom_call.1} parent=1 // pred_fallthru
      _
    // Predicated region
    $region26: #{tpu_custom_call.1} parent=1 // pred_check
      _
    $region27: #{tpu_custom_call.1} parent=1 // pred_check_branch
      %57 = sbr.rel (0) target = $region29
    $region28: #{tpu_custom_call.1} parent=1 // pred_region
      _
    $region29: #{tpu_custom_call.1} parent=1 // pred_fallthru
      _
    // Predicated region
    $region30: #{tpu_custom_call.1} parent=1 // pred_check
      _
    $region31: #{tpu_custom_call.1} parent=1 // pred_check_branch
      %59 = sbr.rel (0) target = $region33
    $region32: #{tpu_custom_call.1} parent=1 // pred_region
      %60 = dma.done [#allocation4], 64
    $region33: #{tpu_custom_call.1} parent=1 // pred_fallthru
      _
    // Predicated region
    $region34: #{tpu_custom_call.1} parent=1 // pred_check
      _
    $region35: #{tpu_custom_call.1} parent=1 // pred_check_branch
      %62 = sbr.rel (0) target = $region37
    $region36: #{tpu_custom_call.1} parent=1 // pred_region
      %63 = dma.done [#allocation6], 256
    $region37: #{tpu_custom_call.1} parent=1 // pred_fallthru
      _
    // Predicated region
    $region38: #{tpu_custom_call.1} parent=1 // pred_check
      _
    $region39: #{tpu_custom_call.1} parent=1 // pred_check_branch
      %65 = sbr.rel (0) target = $region41
    $region40: #{tpu_custom_call.1} parent=1 // pred_region
      %66 = dma.done [#allocation6], 256
    $region41: #{tpu_custom_call.1} parent=1 // pred_fallthru
      _
    %v68 = vld [vmem:[#allocation3] sm:$0xf]
    %v69 = vld [vmem:[#allocation5] sm:$0xf]
    %v70 = vld [vmem:[#allocation5 + $0x4] sm:$0xf]
    %v71 = vld [vmem:[#allocation5 + $0x8] sm:$0xf]
    %v72 = vld [vmem:[#allocation5 + $0xc] sm:$0xf]
    %v73 = vld [vmem:[%s2] sm:$0x1]
    %v75 = vlaneseq
    %v76 = vshrl.u32 %v75, 7
    %v77 = vsub.s32 0, %v76
    %v78 = vrot.slane %v73, %v77
    %v84 = vunpack.c.l.b16 %v69
    %v85 = vunpack.c.l.b16 %v70
    %v86 = vunpack.c.l.b16 %v71
    %v87 = vunpack.c.l.b16 %v72
    %v88 = vpack.c.b16 %v85, %v84
    %v89 = vpack.c.b16 %v87, %v86
    %vm92 = vcmask 261120
    %v94 = vsel %vm92, %v68, 0
    %96 = vmatprep.subr.bf16.mxu0 0
    %97 = vmatpush1.bf16.msra.mxu0 %v88
    %98 = vmatprep.subr.bf16.mxu0 0
    %99 = vmatpush1.bf16.msra.mxu0 %v89
    %100 = vmatprep.subr.bf16.mxu0 0
    %101 = vmatpush1.bf16.msra.mxu0 0
    %102 = vmatprep.subr.bf16.mxu0 0
    %103 = vmatpush1.bf16.msra.mxu0 0
    %104 = vmatprep.subr.bf16.mxu0 0
    %105 = vmatpush1.bf16.msra.mxu0 0
    %106 = vmatprep.subr.bf16.mxu0 0
    %107 = vmatpush1.bf16.msra.mxu0 0
    %108 = vmatprep.subr.bf16.mxu0 0
    %109 = vmatpush1.bf16.msra.mxu0 0
    %110 = vmatprep.subr.bf16.mxu0 0
    %111 = vmatpush1.bf16.msra.mxu0 0
    %112 = vmatprep.subr.bf16.mxu0 0
    %113 = vmatpush1.bf16.msra.mxu0 0
    %114 = vmatprep.subr.bf16.mxu0 0
    %115 = vmatpush1.bf16.msra.mxu0 0
    %116 = vmatprep.subr.bf16.mxu0 0
    %117 = vmatpush1.bf16.msra.mxu0 0
    %118 = vmatprep.subr.bf16.mxu0 0
    %119 = vmatpush1.bf16.msra.mxu0 0
    %120 = vmatprep.subr.bf16.mxu0 0
    %121 = vmatpush1.bf16.msra.mxu0 0
    %122 = vmatprep.subr.bf16.mxu0 0
    %123 = vmatpush1.bf16.msra.mxu0 0
    %124 = vmatprep.subr.bf16.mxu0 0
    %125 = vmatpush1.bf16.msra.mxu0 0
    %126 = vmatprep.subr.bf16.mxu0 0
    %127 = vmatpush1.bf16.msra.mxu0 0
    %128 = vmatprep.mubr.bf16.mxu0 0
    %129 = vmatmul.mubr.bf16.gmra.mrb[0].mxu0 %v94
    %v130 = vpop.f32.mrb[0].mxu0
    %v131 = vadd.f32 %v78, %v130
    %v132 = vpop.f32.mrb[0].mxu0
    %v133 = vpop.f32.mrb[0].mxu0
    %v134 = vpop.f32.mrb[0].mxu0
    %135 = vdwg.mxu0
    %v136 = vtanh.pop %v131
    %v137 = vpack.c.bf16 %v136, %v136
    %v138 = vld [vmem:[#allocation7] sm:$0xf]
    %v139 = vld [vmem:[#allocation7 + $0x4] sm:$0xf]
    %v140 = vld [vmem:[#allocation7 + $0x8] sm:$0xf]
    %v141 = vld [vmem:[#allocation7 + $0xc] sm:$0xf]
    %v142 = vld [vmem:[%s4] sm:$0x1]
    %v144 = vlaneseq
    %v145 = vshrl.u32 %v144, 7
    %v146 = vsub.s32 0, %v145
    %v147 = vrot.slane %v142, %v146
    %v153 = vunpack.c.l.b16 %v138
    %v154 = vunpack.c.l.b16 %v139
    %v155 = vunpack.c.l.b16 %v140
    %v156 = vunpack.c.l.b16 %v141
    %v157 = vpack.c.b16 %v154, %v153
    %v158 = vpack.c.b16 %v156, %v155
    %v162 = vsel %vm92, %v137, 0
    %164 = vmatprep.subr.bf16.mxu0 0
    %165 = vmatpush1.bf16.msra.mxu0 %v157
    %166 = vmatprep.subr.bf16.mxu0 0
    %167 = vmatpush1.bf16.msra.mxu0 %v158
    %168 = vmatprep.subr.bf16.mxu0 0
    %169 = vmatpush1.bf16.msra.mxu0 0
    %170 = vmatprep.subr.bf16.mxu0 0
    %171 = vmatpush1.bf16.msra.mxu0 0
    %172 = vmatprep.subr.bf16.mxu0 0
    %173 = vmatpush1.bf16.msra.mxu0 0
    %174 = vmatprep.subr.bf16.mxu0 0
    %175 = vmatpush1.bf16.msra.mxu0 0
    %176 = vmatprep.subr.bf16.mxu0 0
    %177 = vmatpush1.bf16.msra.mxu0 0
    %178 = vmatprep.subr.bf16.mxu0 0
    %179 = vmatpush1.bf16.msra.mxu0 0
    %180 = vmatprep.subr.bf16.mxu0 0
    %181 = vmatpush1.bf16.msra.mxu0 0
    %182 = vmatprep.subr.bf16.mxu0 0
    %183 = vmatpush1.bf16.msra.mxu0 0
    %184 = vmatprep.subr.bf16.mxu0 0
    %185 = vmatpush1.bf16.msra.mxu0 0
    %186 = vmatprep.subr.bf16.mxu0 0
    %187 = vmatpush1.bf16.msra.mxu0 0
    %188 = vmatprep.subr.bf16.mxu0 0
    %189 = vmatpush1.bf16.msra.mxu0 0
    %190 = vmatprep.subr.bf16.mxu0 0
    %191 = vmatpush1.bf16.msra.mxu0 0
    %192 = vmatprep.subr.bf16.mxu0 0
    %193 = vmatpush1.bf16.msra.mxu0 0
    %194 = vmatprep.subr.bf16.mxu0 0
    %195 = vmatpush1.bf16.msra.mxu0 0
    %196 = vmatprep.mubr.bf16.mxu0 0
    %197 = vmatmul.mubr.bf16.gmra.mrb[0].mxu0 %v162
    %v198 = vpop.f32.mrb[0].mxu0
    %v199 = vadd.f32 %v147, %v198
    %v200 = vpop.f32.mrb[0].mxu0
    %v201 = vpop.f32.mrb[0].mxu0
    %v202 = vpop.f32.mrb[0].mxu0
    %203 = vdwg.mxu0
    %v204 = vtanh.pop %v199
    %v205 = vld [vmem:[%s5] sm:$0x1]
    %v207 = vlaneseq
    %v208 = vshrl.u32 %v207, 7
    %v209 = vsub.s32 0, %v208
    %v210 = vrot.slane %v205, %v209
    %v212 = vmul.f32 %v204, %v210
    %v213 = vsel %vm92, %v212, 0.0
    %214 = vadd.xlane.f32.xlu0 %v213
    %v215 = vpop.xlane.xlu0 %214
    %v216 = vld [vmem:[#allocation2] sm:$0x1]
    %v218 = vlaneseq
    %v219 = vshrl.u32 %v218, 7
    %v220 = vsub.s32 0, %v219
    %v221 = vrot.slane %v216, %v220
    %v223 = vadd.f32 %v215, %v221
    %vm224 = vcmask 7168
    %225 = vst.msk [vmem:[%s7] sm:$0xff] %vm224, %v223
    // Predicated region
    $region42: #{tpu_custom_call.1} parent=1 // pred_check
      _
    $region43: #{tpu_custom_call.1} parent=1 // pred_check_branch
      %227 = sbr.rel (0) target = $region45
    $region44: #{tpu_custom_call.1} parent=1 // pred_region
      _
    $region45: #{tpu_custom_call.1} parent=1 // pred_fallthru
      _
    // Predicated region
    $region46: #{tpu_custom_call.1} parent=1 // pred_check
      _
    $region47: #{tpu_custom_call.1} parent=1 // pred_check_branch
      %229 = sbr.rel (0) target = $region49
    $region48: #{tpu_custom_call.1} parent=1 // pred_region
      _
    $region49: #{tpu_custom_call.1} parent=1 // pred_fallthru
      _
    %230 = vsyncpa [#allocation4], 1
    %231 = vsyncpa [#allocation6], 1

</llo_original>
